<compile_context>
chip_gen: v5e
topology: v5e:2x2
jax: 0.10.0
libtpu: 0.0.40
codegen_flags: <defaults>
</compile_context>

<pallas_src>
import functools

import jax
import jax.numpy as jnp
from jax.experimental import pallas as pl
from jax.experimental.pallas import tpu as pltpu


def _ce_label_smooth_kernel(x_ref, xt_ref, out_ref, *, epsilon, num_classes,
                            total_b, block_b, upcast):
    """Per-tile partial sum of label-smoothed cross entropy.

    x_ref:   (TB, C)      logits tile
    xt_ref:  (TB, 1)      f32 pre-gathered target logits x[b, t_b]
    out_ref: (1, 8, 128)  f32 per-tile partial sum (lane-dense broadcast store)
    """
    i = pl.program_id(0)
    x = x_ref[...]
    if upcast:
        x = x.astype(jnp.float32)
    tb, _ = x.shape

    # Stable log-softmax pieces.  Elementwise chain stays in the input dtype
    # (bf16 on v6e/v7x halves vreg traffic); reductions accumulate in f32.
    m = jnp.max(x, axis=1, keepdims=True)                              # (TB, 1)
    z = x - m                                                          # (TB, C)
    sum_exp = jnp.sum(jnp.exp(z).astype(jnp.float32), axis=1, keepdims=True)
    sum_z = jnp.sum(z.astype(jnp.float32), axis=1, keepdims=True)      # (TB, 1)
    lse = jnp.log(sum_exp)                                             # (TB, 1)

    # Target logit was pre-gathered outside the kernel, so no iota/compare/
    # select pass over the (TB, C) tile is needed here.
    z_t = xt_ref[...] - m.astype(jnp.float32)                          # (TB, 1)

    # per_row = (1-eps)*(lse - z_t) + (eps/C)*(C*lse - sum_z), simplified:
    per_row = lse - (1.0 - epsilon) * z_t - (epsilon / num_classes) * sum_z

    # Mask rows past the real batch.  The ragged last tile reads undefined
    # (possibly inf/NaN-producing) data, so mask per-row BEFORE any cross-row
    # combine; select does not propagate NaN from the unselected branch.
    row_ids = i * block_b + jax.lax.broadcasted_iota(jnp.int32, (tb, 1), 0)
    per_row = jnp.where(row_ids < total_b, per_row, 0.0)

    out_ref[...] = jnp.full(out_ref.shape, jnp.sum(per_row), dtype=jnp.float32)


def _pick_block_b(batch, num_classes, itemsize):
    """Rows per tile.

    ~2 MiB per logits buffer: with the double-buffered input plus ~3 block-
    sized elementwise temps (z, exp(z), upcast) the real VMEM footprint is
    ~5-6x this, comfortably under the 32 MiB scoped default on v5e/v6e/v7x.
    """
    # TODO(synk): for vocab-scale num_classes (C >~ 100k) add a class-axis
    # ("arbitrary") grid dimension with online max/sum-exp accumulation
    # instead of relying on the >=8-row floor here.
    target_bytes = 2 * 1024 * 1024
    rows = max(8, target_bytes // max(1, num_classes * itemsize))
    # Cap rows so the lane-sparse (TB, 1) column intermediates and the final
    # column reduce stay a small fraction of the work when C is small.
    rows = min(rows, 2048)
    rows = max(8, (rows // 8) * 8)
    if batch <= 8:
        return batch  # cannot tile below 8 rows (sublane constraint)
    # Guarantee >= 2 grid steps: shards the "parallel" batch axis across
    # v7x's two TensorCores and gives the double-buffer pipeline overlap.
    half = (((batch + 1) // 2) + 7) // 8 * 8
    return min(rows, half)


def cross_entropy_label_smooth(inputs, targets, *, num_classes, epsilon=0.1,
                               block_b=None, upcast_to_f32=None):
    """inputs: (B, num_classes) float logits; targets: (B,) int labels.
    Returns the scalar label-smoothed CE loss (f32)."""
    batch, c = inputs.shape
    assert c == num_classes

    if upcast_to_f32 is None:
        # Keep bf16 elementwise math (native bf16 VPU/EUP on v6e/v7x).
        # TODO(synk): force True on v5e (no bf16 VPU/EUP) via a hw query.
        upcast_to_f32 = inputs.dtype == jnp.float32

    # O(B) gather of the target logit, done once in XLA outside the kernel.
    targets_i32 = targets.astype(jnp.int32).reshape(batch, 1)
    x_t = jnp.take_along_axis(inputs, targets_i32, axis=1).astype(jnp.float32)

    if block_b is None:
        block_b = _pick_block_b(batch, c, inputs.dtype.itemsize)
    if block_b < batch:
        assert block_b % 8 == 0, "block_b must be a multiple of 8 when tiling"
    num_tiles = (batch + block_b - 1) // block_b

    kernel = functools.partial(
        _ce_label_smooth_kernel,
        epsilon=float(epsilon), num_classes=c, total_b=batch,
        block_b=block_b, upcast=bool(upcast_to_f32))

    partials = pl.pallas_call(
        kernel,
        out_shape=jax.ShapeDtypeStruct((num_tiles, 8, 128), jnp.float32),
        grid_spec=pltpu.PrefetchScalarGridSpec(
            num_scalar_prefetch=0,
            grid=(num_tiles,),
            in_specs=[
                pl.BlockSpec((block_b, c), lambda i: (i, 0)),
                pl.BlockSpec((block_b, 1), lambda i: (i, 0)),
            ],
            out_specs=pl.BlockSpec((1, 8, 128), lambda i: (i, 0, 0)),
        ),
        compiler_params=pltpu.CompilerParams(
            dimension_semantics=("parallel",),
            vmem_limit_bytes=32 * 1024 * 1024,
        ),
    )(inputs, x_t)

    # Final reduction and /B — all other scalings already folded per-row.
    return jnp.sum(partials[:, 0, 0]) / batch


def _reference(inputs, targets, num_classes, epsilon):
    log_probs = jax.nn.log_softmax(inputs.astype(jnp.float32), axis=1)
    one_hot = jax.nn.one_hot(targets, num_classes, dtype=jnp.float32)
    smoothed = (1.0 - epsilon) * one_hot + epsilon / num_classes
    return jnp.sum(jnp.mean(-smoothed * log_probs, axis=0))


if __name__ == "__main__":
    key = jax.random.PRNGKey(0)
    k1, k2, k3, k4, k5, k6 = jax.random.split(key, 6)
    eps = 0.1

    # Case 1: explicit tiling across a grid of 4, lane-aligned classes.
    b1, c1 = 32, 128
    x1 = jax.random.normal(k1, (b1, c1), dtype=jnp.float32)
    t1 = jax.random.randint(k2, (b1,), 0, c1, dtype=jnp.int32)
    loss1 = jax.block_until_ready(
        cross_entropy_label_smooth(x1, t1, num_classes=c1, epsilon=eps, block_b=8))
    ref1 = _reference(x1, t1, c1, eps)
    assert jnp.allclose(loss1, ref1, atol=1e-5, rtol=1e-5), (loss1, ref1)

    # Case 2: ragged last tile (13 rows, block_b=8) exercises the row mask.
    b2, c2 = 13, 16
    x2 = jax.random.normal(k3, (b2, c2), dtype=jnp.float32)
    t2 = jax.random.randint(k4, (b2,), 0, c2, dtype=jnp.int32)
    loss2 = jax.block_until_ready(
        cross_entropy_label_smooth(x2, t2, num_classes=c2, epsilon=eps, block_b=8))
    ref2 = _reference(x2, t2, c2, eps)
    assert jnp.allclose(loss2, ref2, atol=1e-5, rtol=1e-5), (loss2, ref2)

    # Case 3: auto block_b (splits into >=2 tiles for megacore), f32 and bf16.
    b3, c3 = 48, 256
    x3 = jax.random.normal(k5, (b3, c3), dtype=jnp.float32)
    t3 = jax.random.randint(k6, (b3,), 0, c3, dtype=jnp.int32)
    loss3 = jax.block_until_ready(
        cross_entropy_label_smooth(x3, t3, num_classes=c3, epsilon=eps))
    ref3 = _reference(x3, t3, c3, eps)
    assert jnp.allclose(loss3, ref3, atol=1e-5, rtol=1e-5), (loss3, ref3)

    x3b = x3.astype(jnp.bfloat16)
    loss3b = jax.block_until_ready(
        cross_entropy_label_smooth(x3b, t3, num_classes=c3, epsilon=eps))
    ref3b = _reference(x3b.astype(jnp.float32), t3, c3, eps)
    assert jnp.allclose(loss3b, ref3b, atol=5e-2, rtol=5e-2), (loss3b, ref3b)

    print("KERNEL_OK")
</pallas_src>

<mosaic_0001>
module attributes {stable_mosaic.version = 11 : i64} {
  func.func @_ce_label_smooth_kernel(%arg0: i32, %arg1: memref<8x128xf32, #tpu.memory_space<vmem>>, %arg2: memref<8x1xf32, #tpu.memory_space<vmem>>, %arg3: memref<1x8x128xf32, #tpu.memory_space<vmem>>) attributes {dimension_semantics = [#tpu.dimension_semantics<parallel>], iteration_bounds = array<i64: 4>, scalar_prefetch = 0 : i64, scratch_operands = 0 : i64, tpu.core_type = #tpu.core_type<tc>, window_params = [{transform_indices = @transform_0, window_bounds = array<i64: 8, 128>}, {transform_indices = @transform_1, window_bounds = array<i64: 8, 1>}, {transform_indices = @transform_2, window_bounds = array<i64: 1, 8, 128>}]} {
    %c0 = arith.constant 0 : index
    %c0_0 = arith.constant 0 : index
    %0 = vector.load %arg1[%c0, %c0_0] : memref<8x128xf32, #tpu.memory_space<vmem>>, vector<8x128xf32>
    %cst = arith.constant dense<0xFF800000> : vector<8xf32>
    %1 = vector.multi_reduction <maximumf>, %0, %cst [1] : vector<8x128xf32> to vector<8xf32>
    %2 = vector.shape_cast %1 : vector<8xf32> to vector<8x1xf32>
    %3 = vector.broadcast %2 : vector<8x1xf32> to vector<8x128xf32>
    %4 = arith.subf %0, %3 : vector<8x128xf32>
    %5 = math.exp %4 : vector<8x128xf32>
    %cst_1 = arith.constant dense<0.000000e+00> : vector<8xf32>
    %6 = vector.multi_reduction <add>, %5, %cst_1 [1] : vector<8x128xf32> to vector<8xf32>
    %7 = vector.shape_cast %6 : vector<8xf32> to vector<8x1xf32>
    %cst_2 = arith.constant dense<0.000000e+00> : vector<8xf32>
    %8 = vector.multi_reduction <add>, %4, %cst_2 [1] : vector<8x128xf32> to vector<8xf32>
    %9 = vector.shape_cast %8 : vector<8xf32> to vector<8x1xf32>
    %10 = math.log %7 : vector<8x1xf32>
    %c0_3 = arith.constant 0 : index
    %c0_4 = arith.constant 0 : index
    %11 = vector.load %arg2[%c0_3, %c0_4] : memref<8x1xf32, #tpu.memory_space<vmem>>, vector<8x1xf32>
    %12 = arith.subf %11, %2 : vector<8x1xf32>
    %cst_5 = arith.constant 0.899999976 : f32
    %13 = vector.broadcast %cst_5 : f32 to vector<8x1xf32>
    %14 = arith.mulf %13, %12 : vector<8x1xf32>
    %15 = arith.subf %10, %14 : vector<8x1xf32>
    %cst_6 = arith.constant 7.812500e-04 : f32
    %16 = vector.broadcast %cst_6 : f32 to vector<8x1xf32>
    %17 = arith.mulf %16, %9 : vector<8x1xf32>
    %18 = arith.subf %15, %17 : vector<8x1xf32>
    %c8_i32 = arith.constant 8 : i32
    %19 = arith.muli %arg0, %c8_i32 : i32
    %20 = tpu.iota {dimensions = array<i32: 0>} : vector<8x1xi32>
    %21 = vector.broadcast %19 : i32 to vector<8x1xi32>
    %22 = arith.addi %21, %20 : vector<8x1xi32>
    %c32_i32 = arith.constant 32 : i32
    %23 = vector.broadcast %c32_i32 : i32 to vector<8x1xi32>
    %24 = arith.cmpi slt, %22, %23 : vector<8x1xi32>
    %cst_7 = arith.constant 0.000000e+00 : f32
    %25 = vector.broadcast %cst_7 : f32 to vector<8x1xf32>
    %26 = arith.select %24, %18, %25 : vector<8x1xi1>, vector<8x1xf32>
    %27 = vector.shape_cast %26 : vector<8x1xf32> to vector<1x8x1xf32>
    %cst_8 = arith.constant dense<0.000000e+00> : vector<1xf32>
    %28 = vector.multi_reduction <add>, %27, %cst_8 [1, 2] : vector<1x8x1xf32> to vector<1xf32>
    %29 = vector.shape_cast %28 : vector<1xf32> to vector<1x1x1xf32>
    %30 = vector.extract %29[0, 0, 0] : f32 from vector<1x1x1xf32>
    %31 = vector.broadcast %30 : f32 to vector<1x8x128xf32>
    %c0_9 = arith.constant 0 : index
    %c0_10 = arith.constant 0 : index
    %c0_11 = arith.constant 0 : index
    %32 = vector.load %arg3[%c0_9, %c0_10, %c0_11] : memref<1x8x128xf32, #tpu.memory_space<vmem>>, vector<1x8x128xf32>
    tpu.vector_store %arg3[%c0_9, %c0_10, %c0_11], %31 {strides = array<i32>} : memref<1x8x128xf32, #tpu.memory_space<vmem>>, vector<1x8x128xf32>,
    return
  }
  func.func @transform_0(%arg0: i32) -> (i32, i32) {
    %c0_i32 = arith.constant 0 : i32
    %c0_i32_0 = arith.constant 0 : i32
    return %arg0, %c0_i32 : i32, i32
  }
  func.func @transform_1(%arg0: i32) -> (i32, i32) {
    %c0_i32 = arith.constant 0 : i32
    %c0_i32_0 = arith.constant 0 : i32
    return %arg0, %c0_i32 : i32, i32
  }
  func.func @transform_2(%arg0: i32) -> (i32, i32, i32) {
    %c0_i32 = arith.constant 0 : i32
    %c0_i32_0 = arith.constant 0 : i32
    %c0_i32_1 = arith.constant 0 : i32
    return %arg0, %c0_i32, %c0_i32_0 : i32, i32, i32
  }
}

</mosaic_0001>

<llo_original>
// kernel: tpu_custom_call.1
$region0: #{tpu_custom_call.1}
  #allocation0 [shape = 'u32[]', space=smem, size = 0x4, offset = 0x4, fixed_abs, tag = 'smem constant byte address 0x4 - core index']
  #allocation1 [shape = 'u32[72,128]{1,0:T(1,128)}', space=vmem, size = 0x9000, scoped, tag = 'internal scratch']
  %s0 = inlined_call_operand.vmem [shape: f32[32,128], index: 0, kind: input, shape index: {}]
  %s1 = inlined_call_operand.vmem [shape: f32[32,1], index: 1, kind: input, shape index: {}]
  %s2 = inlined_call_operand.hbm [shape: f32[4,8,128], index: 2, kind: output, shape index: {}]
  %s3 = sld [smem:[#allocation0]]
  $region41: #{tpu_custom_call.1} parent=0
    _
  %s5 = ssub.s32 1, %s3
  %s6 = scalar_select 0, %s5, %s3
  $region1: #{tpu_custom_call.1} parent=0
    #allocation2 [shape = 'u8[8192]{0}', space=vmem, size = 0x2000, scoped, tag = 'output window, operand 0']
    #allocation3 [shape = 's32[2]{0}', space=sflag, size = 0x8, scoped, tag = 'scoped memory for tpu_custom_call.1']
    %7 = vsyncpa [#allocation3], 0
    %s8 = scalar_lea.sflag [#allocation3], 1
    %9 = vsyncpa %s8, 0
    loop: start=0, step=1, limit=6
    $region2: #{tpu_custom_call.1} parent=1 // loop_pre_header
      _
    $region3: #{tpu_custom_call.1} parent=1 // loop_header
      %s11 = sphi 0, %s15
      %p12 = scmp.ge.s32.totalorder %s11, 6
      %s21 = sphi 0, %s23
      %s24 = sphi 0, %s21
      %s25 = sphi 0, %s24
      %s41 = sphi 0, %s25
      %s47 = sphi 0, %s49
      %s50 = sphi 0, %s47
      %s51 = sphi 0, %s50
      %s67 = sphi 0, %s51
      %s73 = sphi 0, %s75
      %s76 = sphi 0, %s73
      %s77 = sphi 0, %s76
      %s93 = sphi 0, %s77
    $region4: #{tpu_custom_call.1} parent=1 // loop_header_branch
      %14 = sbr.rel (%p12) target = $region8
    $region5: #{tpu_custom_call.1} parent=1 // loop_body
      %s16 = ssub.s32 %s11, 1
      %s17 = ssub.s32 %s11, 2
      %s18 = sadd.s32 %s11, 1
      %s19 = ssub.s32 %s11, %s18
      %p20 = scmp.eq.s32.totalorder %s19, 0
      %s22 = sadd.s32 %s21, 1
      %s23 = scalar_select %p20, %s21, %s22
      %p26 = pneg %p20
      %p27 = scmp.eq.s32.totalorder %s11, 3
      %p28 = por %p26, %p27
      %p29 = scmp.ne.s32.totalorder %s21, %s24
      %p30 = scmp.eq.s32.totalorder %s11, 0
      %p31 = por %p29, %p30
      %p32 = scmp.ne.s32.totalorder %s21, %s24
      %p33 = scmp.eq.s32.totalorder %s16, 3
      %p34 = por %p32, %p33
      %p35 = scmp.ne.s32.totalorder %s24, %s25
      %p36 = scmp.eq.s32.totalorder %s16, 0
      %p37 = por %p35, %p36
      %p38 = scmp.ne.s32.totalorder %s24, %s25
      %p39 = scmp.eq.s32.totalorder %s17, 3
      %p40 = por %p38, %p39
      %p42 = scmp.ne.s32.totalorder %s25, %s41
      %p43 = scmp.eq.s32.totalorder %s17, 0
      %p44 = por %p42, %p43
      %s45 = ssub.s32 %s11, %s18
      %p46 = scmp.eq.s32.totalorder %s45, 0
      %s48 = sadd.s32 %s47, 1
      %s49 = scalar_select %p46, %s47, %s48
      %p52 = pneg %p46
      %p53 = scmp.eq.s32.totalorder %s11, 3
      %p54 = por %p52, %p53
      %p55 = scmp.ne.s32.totalorder %s47, %s50
      %p56 = scmp.eq.s32.totalorder %s11, 0
      %p57 = por %p55, %p56
      %p58 = scmp.ne.s32.totalorder %s47, %s50
      %p59 = scmp.eq.s32.totalorder %s16, 3
      %p60 = por %p58, %p59
      %p61 = scmp.ne.s32.totalorder %s50, %s51
      %p62 = scmp.eq.s32.totalorder %s16, 0
      %p63 = por %p61, %p62
      %p64 = scmp.ne.s32.totalorder %s50, %s51
      %p65 = scmp.eq.s32.totalorder %s17, 3
      %p66 = por %p64, %p65
      %p68 = scmp.ne.s32.totalorder %s51, %s67
      %p69 = scmp.eq.s32.totalorder %s17, 0
      %p70 = por %p68, %p69
      %s71 = ssub.s32 %s11, %s18
      %p72 = scmp.eq.s32.totalorder %s71, 0
      %s74 = sadd.s32 %s73, 1
      %s75 = scalar_select %p72, %s73, %s74
      %p78 = pneg %p72
      %p79 = scmp.eq.s32.totalorder %s11, 3
      %p80 = por %p78, %p79
      %p81 = scmp.ne.s32.totalorder %s73, %s76
      %p82 = scmp.eq.s32.totalorder %s11, 0
      %p83 = por %p81, %p82
      %p84 = scmp.ne.s32.totalorder %s73, %s76
      %p85 = scmp.eq.s32.totalorder %s16, 3
      %p86 = por %p84, %p85
      %p87 = scmp.ne.s32.totalorder %s76, %s77
      %p88 = scmp.eq.s32.totalorder %s16, 0
      %p89 = por %p87, %p88
      %p90 = scmp.ne.s32.totalorder %s76, %s77
      %p91 = scmp.eq.s32.totalorder %s17, 3
      %p92 = por %p90, %p91
      %p94 = scmp.ne.s32.totalorder %s77, %s93
      %p95 = scmp.eq.s32.totalorder %s17, 0
      %p96 = por %p94, %p95
      %p97 = scmp.le.s32.totalorder 1, %s11
      %p98 = scmp.lt.s32.totalorder %s11, 5
      %p99 = pnand %p97, %p98
      %p100 = pneg %p99
      // Predicated region
      $region9: #{tpu_custom_call.1} parent=5 // pred_check
        _
      $region10: #{tpu_custom_call.1} parent=5 // pred_check_branch
        %102 = sbr.rel (%p99) target = $region12
      $region11: #{tpu_custom_call.1} parent=5 // pred_region
        %s103 = ssub.s32 %s11, 1
      $region12: #{tpu_custom_call.1} parent=5 // pred_fallthru
        _
      %p104 = scmp.lt.s32.totalorder %s11, 4
      // Predicated region
      $region13: #{tpu_custom_call.1} parent=5 // pred_check
        %p105 = pneg %p104
      $region14: #{tpu_custom_call.1} parent=5 // pred_check_branch
        %107 = sbr.rel (%p105) target = $region16
      $region15: #{tpu_custom_call.1} parent=5 // pred_region
        // Predicated region
        $region17: #{tpu_custom_call.1} parent=15 // pred_check
          %p108 = pneg %p31
        $region18: #{tpu_custom_call.1} parent=15 // pred_check_branch
          %110 = sbr.rel (%p108) target = $region20
        $region19: #{tpu_custom_call.1} parent=15 // pred_region
          %p111 = scmp.lt.s32.totalorder %s11, 3
          %s112 = scalar_select %p111, %s11, 3
          %s113 = smul.addr %s112, 8
          %s114 = scalar_lea.vmem %s0, %s113
        $region20: #{tpu_custom_call.1} parent=15 // pred_fallthru
          _
        // Predicated region
        $region21: #{tpu_custom_call.1} parent=15 // pred_check
          %p115 = pneg %p57
        $region22: #{tpu_custom_call.1} parent=15 // pred_check_branch
          %117 = sbr.rel (%p115) target = $region24
        $region23: #{tpu_custom_call.1} parent=15 // pred_region
          %p118 = scmp.lt.s32.totalorder %s11, 3
          %s119 = scalar_select %p118, %s11, 3
          %s120 = smul.addr %s119, 8
          %s121 = scalar_lea.vmem %s1, %s120
        $region24: #{tpu_custom_call.1} parent=15 // pred_fallthru
          _
      $region16: #{tpu_custom_call.1} parent=5 // pred_fallthru
        _
      %p122 = scmp.le.s32.totalorder 1, %s11
      %p123 = scmp.lt.s32.totalorder %s11, 5
      %p124 = pnand %p122, %p123
      %p125 = pneg %p124
      // Predicated region
      $region25: #{tpu_custom_call.1} parent=5 // pred_check
        _
      $region26: #{tpu_custom_call.1} parent=5 // pred_check_branch
        %127 = sbr.rel (%p124) target = $region28
      $region27: #{tpu_custom_call.1} parent=5 // pred_region
        %s128 = ssub.s32 %s11, 1
        %p129 = scmp.lt.s32.totalorder %s16, 3
        %s130 = scalar_select %p129, %s16, 3
        %s131 = smul.addr %s130, 8
        %s132 = scalar_lea.vmem %s0, %s131
        %p133 = pneg %p37
        %p134 = pneg %p34
        %p135 = scmp.lt.s32.totalorder %s16, 3
        %s136 = scalar_select %p135, %s16, 3
        %s137 = smul.addr %s136, 8
        %s138 = scalar_lea.vmem %s1, %s137
        %p139 = pneg %p63
        %p140 = pneg %p60
        %p141 = pneg %p89
        %p142 = pneg %p86
        %s143 = sand.u32 %s76, 1
        %s144 = scalar_lea.sflag [#allocation3], %s143
        %s145 = sand.u32 %s76, 1
        %s146 = smul.addr %s145, 8
        %s147 = scalar_lea.vmem [#allocation2], %s146
        %p148 = scmp.lt.s32.totalorder %s16, 3
        %s149 = scalar_select %p148, %s16, 3
        %s150 = smul.addr %s149, 8
        %s151 = scalar_lea.vmem %s0, %s150
        %p152 = scmp.lt.s32.totalorder %s16, 3
        %s153 = scalar_select %p152, %s16, 3
        %s154 = smul.addr %s153, 8
        %s155 = scalar_lea.vmem %s1, %s154
        %v156 = vld [vmem:[%s151] sm:$0xff]
        %157 = vmax.xlane.f32.xlu0 %v156
        %v158 = vpop.xlane.xlu0 %157
        %v159 = vsub.f32 %v156, %v158
        %v160 = vmul.f32 %v159, 1.442695
        %v161 = vpow.pop %v160
        %162 = vadd.xlane.f32.xlu0 %v161
        %v163 = vpop.xlane.xlu0 %162
        %164 = vadd.xlane.f32.xlu0 %v159
        %v165 = vpop.xlane.xlu0 %164
        %v166 = vlog2.pop %v163
        %v167 = vmul.f32 %v166, 0.6931472
        %v168 = vld [vmem:[%s155] sm:$0xff]
        %v169 = vsub.f32 %v168, %v158
        %v170 = vmul.f32 %v169, 0.9
        %v171 = vsub.f32 %v167, %v170
        %v172 = vmul.f32 %v165, 0.00078125
        %v173 = vsub.f32 %v171, %v172
        %s174 = smul.u32 %s16, 8
        %v175 = vlaneseq
        %v176 = vshrl.u32 %v175, 7
        %v177 = vstv %s174
        %v178 = vadd.s32 %v177, %v176
        %vm179 = vcmp.lt.s32.totalorder %v178, 32
        %v180 = vsel %vm179, %v173, 0.0
        %vm181 = vcmask 7168
        %v182 = vsel %vm181, %v180, 0.0
        %183 = vadd.xlane.f32.xlu0 %v182
        %v184 = vpop.xlane.xlu0 %183
        %v185 = vrot.slane %v184, 4
        %v186 = vadd.f32 %v184, %v185
        %v187 = vrot.slane %v186, 2
        %v188 = vadd.f32 %v186, %v187
        %v189 = vrot.slane %v188, 1
        %v190 = vadd.f32 %v188, %v189
        %s191 = vtos %v190
        %v192 = vstv %s191
        %193 = vst [vmem:[%s147] sm:$0xff] %v192
        %s194 = sand.u32 %s76, 1
        %s195 = scalar_lea.sflag [#allocation3], %s194
        %s196 = sand.u32 %s76, 1
        %s197 = smul.addr %s196, 8
        %s198 = scalar_lea.vmem [#allocation2], %s197
        // Predicated region
        $region29: #{tpu_custom_call.1} parent=27 // pred_check
          %p199 = pneg %p86
        $region30: #{tpu_custom_call.1} parent=27 // pred_check_branch
          %201 = sbr.rel (%p199) target = $region32
        $region31: #{tpu_custom_call.1} parent=27 // pred_region
          %203 = vsyncadd %s195, 0
          %s204 = smul.addr %s16, 8
          %s205 = scalar_lea.hbm %s2, %s204
          %s207 = sshll.u32 %s198, 4
          %s208 = int_to_ptr.vmem [resolvable:$true] %s207
          %s209 = sshll.u32 %s205, 4
          %s210 = int_to_ptr.hbm [resolvable:$true] %s209
          %212 = dma.vmem_to_hbm [thread:$0]  %s208, 128, %s210, %s195
        $region32: #{tpu_custom_call.1} parent=27 // pred_fallthru
          _
      $region28: #{tpu_custom_call.1} parent=5 // pred_fallthru
        _
      %p213 = scmp.le.s32.totalorder 2, %s11
      // Predicated region
      $region33: #{tpu_custom_call.1} parent=5 // pred_check
        %p214 = pneg %p213
      $region34: #{tpu_custom_call.1} parent=5 // pred_check_branch
        %216 = sbr.rel (%p214) target = $region36
      $region35: #{tpu_custom_call.1} parent=5 // pred_region
        %s217 = ssub.s32 %s11, 2
        // Predicated region
        $region37: #{tpu_custom_call.1} parent=35 // pred_check
          %p218 = pneg %p92
        $region38: #{tpu_custom_call.1} parent=35 // pred_check_branch
          %220 = sbr.rel (%p218) target = $region40
        $region39: #{tpu_custom_call.1} parent=35 // pred_region
          %s221 = sand.u32 %s77, 1
          %s222 = scalar_lea.sflag [#allocation3], %s221
          %s223 = sand.u32 %s77, 1
          %s224 = smul.addr %s223, 8
          %s225 = scalar_lea.vmem [#allocation2], %s224
          %227 = dma.done %s222, 128
        $region40: #{tpu_custom_call.1} parent=35 // pred_fallthru
          _
      $region36: #{tpu_custom_call.1} parent=5 // pred_fallthru
        _
    $region6: #{tpu_custom_call.1} parent=1 // loop_footer
      %s15 = sadd.s32 1, %s11
    $region7: #{tpu_custom_call.1} parent=1 // loop_footer_branch
      %10 = sbr.rel target = $region3
    $region8: #{tpu_custom_call.1} parent=1 // loop_exit
      _
    %228 = vsyncpa [#allocation3], 1
    %s229 = scalar_lea.sflag [#allocation3], 1
    %230 = vsyncpa %s229, 1

</llo_original>
